<compile_context>
chip_gen: v6e
topology: v6e:2x2x1
jax: 0.10.0
libtpu: 0.0.40
codegen_flags: <defaults>
</compile_context>

<pallas_src>
import functools

import jax
import jax.numpy as jnp
from jax.experimental import pallas as pl
from jax.experimental.pallas import tpu as pltpu

LANE = 128
SUBLANE = 8


def _round_up(x, m):
    return (x + m - 1) // m * m


# ---------------------------------------------------------------------------
# Kernel: one batch tile per grid step, all weights resident in VMEM.
# ---------------------------------------------------------------------------
def _qfunction_kernel(obs_ref, act_ref, w1o_ref, w1a_ref, b1_ref,
                      w2_ref, b2_ref, w3_ref, b3_ref, out_ref):
    # Layer 1: concat-free -> two MXU dots summed into one f32 accumulator.
    h1 = jnp.dot(obs_ref[...], w1o_ref[...], preferred_element_type=jnp.float32)
    h1 = h1 + jnp.dot(act_ref[...], w1a_ref[...],
                      preferred_element_type=jnp.float32)
    h1 = jnp.maximum(h1 + b1_ref[...], 0.0)           # f32 bias + ReLU (VPU)

    # Layer 2: bf16 MXU operands, f32 accumulation.
    h2 = jnp.dot(h1.astype(w2_ref.dtype), w2_ref[...],
                 preferred_element_type=jnp.float32)
    h2 = jnp.maximum(h2 + b2_ref[...], 0.0)

    # Layer 3: output features padded to 128 lanes -> unmasked lane-dense store.
    q = jnp.dot(h2.astype(w3_ref.dtype), w3_ref[...],
                preferred_element_type=jnp.float32)
    out_ref[...] = (q + b3_ref[...]).astype(out_ref.dtype)


# ---------------------------------------------------------------------------
# Wrapper
# ---------------------------------------------------------------------------
@functools.partial(jax.jit, static_argnames=("tile_b",))
def qfunction_forward(obs, action, kernel_params, *, tile_b=512):
    """Pallas-backed QFunction forward.

    obs: (B, obs_dim) f32, action: (B, act_dim) f32.
    kernel_params: output of prepare_kernel_params (padded / split / bf16).
    Returns q: (B, 1) f32.
    """
    assert obs.shape[0] == action.shape[0]
    w1o, w1a, b1, w2, b2, w3, b3 = kernel_params

    B, obs_dim = obs.shape
    act_dim = action.shape[1]
    out_pad = w3.shape[1]                              # 128 (padded out features)

    # Batch tile: multiple of 8 (sublane), capped at tile_b; pad B up to a
    # whole number of tiles (padded rows are sliced away at the end).
    b8 = _round_up(B, SUBLANE)
    tb = min(tile_b, b8)
    b_pad = _round_up(B, tb)

    compute_dtype = w1o.dtype                          # bfloat16
    x_obs = obs.astype(compute_dtype)
    x_act = action.astype(compute_dtype)
    if b_pad != B:
        x_obs = jnp.pad(x_obs, ((0, b_pad - B), (0, 0)))
        x_act = jnp.pad(x_act, ((0, b_pad - B), (0, 0)))

    batch_map = lambda i: (i, 0)                       # tile over batch
    const_map = lambda i: (0, 0)                       # weights stay resident

    q_pad = pl.pallas_call(
        _qfunction_kernel,
        out_shape=jax.ShapeDtypeStruct((b_pad, out_pad), jnp.float32),
        grid_spec=pltpu.PrefetchScalarGridSpec(
            num_scalar_prefetch=0,
            grid=(b_pad // tb,),
            in_specs=[
                pl.BlockSpec((tb, obs_dim), batch_map),
                pl.BlockSpec((tb, act_dim), batch_map),
                pl.BlockSpec(w1o.shape, const_map),
                pl.BlockSpec(w1a.shape, const_map),
                pl.BlockSpec(b1.shape, const_map),
                pl.BlockSpec(w2.shape, const_map),
                pl.BlockSpec(b2.shape, const_map),
                pl.BlockSpec(w3.shape, const_map),
                pl.BlockSpec(b3.shape, const_map),
            ],
            out_specs=pl.BlockSpec((tb, out_pad), batch_map),
        ),
        compiler_params=pltpu.CompilerParams(
            dimension_semantics=("parallel",)),        # megacore on v7x
    )(x_obs, x_act, w1o, w1a, b1, w2, b2, w3, b3)

    return q_pad[:B, :1]                               # real Q column


# ---------------------------------------------------------------------------
# Parameter helpers
# ---------------------------------------------------------------------------
def init_qfunction_params(key, obs_dim, action_dim, hidden_dim):
    """PyTorch-style params (weights stored as (in, out); nn.Linear init)."""
    in_dim = obs_dim + action_dim
    keys = jax.random.split(key, 6)

    def linear(kw, kb, fan_in, fan_out):
        bound = 1.0 / jnp.sqrt(jnp.float32(fan_in))
        w = jax.random.uniform(kw, (fan_in, fan_out), jnp.float32, -bound, bound)
        b = jax.random.uniform(kb, (1, fan_out), jnp.float32, -bound, bound)
        return w, b

    w1, b1 = linear(keys[0], keys[1], in_dim, hidden_dim)
    w2, b2 = linear(keys[2], keys[3], hidden_dim, hidden_dim)
    w3, b3 = linear(keys[4], keys[5], hidden_dim, 1)
    return (w1, b1, w2, b2, w3, b3)


def prepare_kernel_params(params, obs_dim, *, compute_dtype=jnp.bfloat16):
    """Split W1 (concat-free layer 1), zero-pad feature dims to 128 lanes,
    cast MXU operands to bf16; biases stay f32 (f32 bias-add / ReLU)."""
    w1, b1, w2, b2, w3, b3 = params
    hidden = w1.shape[1]
    h_pad = _round_up(hidden, LANE)
    out_pad = LANE

    def pad2(a, rows, cols):
        return jnp.pad(a, ((0, rows - a.shape[0]), (0, cols - a.shape[1])))

    w1p = pad2(w1, w1.shape[0], h_pad)
    w1o = w1p[:obs_dim].astype(compute_dtype)
    w1a = w1p[obs_dim:].astype(compute_dtype)
    b1p = pad2(b1, 1, h_pad)                            # f32
    w2p = pad2(w2, h_pad, h_pad).astype(compute_dtype)
    b2p = pad2(b2, 1, h_pad)
    w3p = pad2(w3, h_pad, out_pad).astype(compute_dtype)
    b3p = pad2(b3, 1, out_pad)
    return (w1o, w1a, b1p, w2p, b2p, w3p, b3p)


def qfunction_ref(obs, action, params, *, quantize_like_kernel=True):
    """Pure-JAX reference (uses the original, un-padded, un-split params)."""
    w1, b1, w2, b2, w3, b3 = params

    def q(a):
        if quantize_like_kernel:                       # mirror bf16 MXU inputs
            return a.astype(jnp.bfloat16).astype(jnp.float32)
        return a.astype(jnp.float32)

    x = jnp.concatenate([obs, action], axis=1)
    h1 = jnp.maximum(q(x) @ q(w1) + b1, 0.0)
    h2 = jnp.maximum(q(h1) @ q(w2) + b2, 0.0)
    return q(h2) @ q(w3) + b3


if __name__ == "__main__":
    obs_dim, action_dim, hidden_dim = 16, 8, 32
    batch = 8

    key = jax.random.PRNGKey(0)
    k_obs, k_act, k_params = jax.random.split(key, 3)

    obs = jax.random.normal(k_obs, (batch, obs_dim), jnp.float32)
    action = jax.random.normal(k_act, (batch, action_dim), jnp.float32)

    params = init_qfunction_params(k_params, obs_dim, action_dim, hidden_dim)
    kparams = prepare_kernel_params(params, obs_dim)

    q_out = qfunction_forward(obs, action, kparams)
    jax.block_until_ready(q_out)

    assert q_out.shape == (batch, 1)
    q_ref = qfunction_ref(obs, action, params)
    max_err = float(jnp.max(jnp.abs(q_out - q_ref)))
    assert jnp.allclose(q_out, q_ref, atol=2e-3, rtol=2e-3), max_err

    print("KERNEL_OK")
</pallas_src>

<mosaic_0001>
module attributes {stable_mosaic.version = 11 : i64} {
  func.func @_qfunction_kernel(%arg0: i32, %arg1: memref<8x16xbf16, #tpu.memory_space<vmem>>, %arg2: memref<8x8xbf16, #tpu.memory_space<vmem>>, %arg3: memref<16x128xbf16, #tpu.memory_space<vmem>>, %arg4: memref<8x128xbf16, #tpu.memory_space<vmem>>, %arg5: memref<1x128xf32, #tpu.memory_space<vmem>>, %arg6: memref<128x128xbf16, #tpu.memory_space<vmem>>, %arg7: memref<1x128xf32, #tpu.memory_space<vmem>>, %arg8: memref<128x128xbf16, #tpu.memory_space<vmem>>, %arg9: memref<1x128xf32, #tpu.memory_space<vmem>>, %arg10: memref<8x128xf32, #tpu.memory_space<vmem>>) attributes {dimension_semantics = [#tpu.dimension_semantics<parallel>], iteration_bounds = array<i64: 1>, scalar_prefetch = 0 : i64, scratch_operands = 0 : i64, tpu.core_type = #tpu.core_type<tc>, window_params = [{transform_indices = @transform_0, window_bounds = array<i64: 8, 16>}, {transform_indices = @transform_1, window_bounds = array<i64: 8, 8>}, {pipeline_mode = #tpu.pipeline_mode<synchronous>, transform_indices = @transform_2, window_bounds = array<i64: 16, 128>}, {pipeline_mode = #tpu.pipeline_mode<synchronous>, transform_indices = @transform_3, window_bounds = array<i64: 8, 128>}, {pipeline_mode = #tpu.pipeline_mode<synchronous>, transform_indices = @transform_4, window_bounds = array<i64: 1, 128>}, {pipeline_mode = #tpu.pipeline_mode<synchronous>, transform_indices = @transform_5, window_bounds = array<i64: 128, 128>}, {pipeline_mode = #tpu.pipeline_mode<synchronous>, transform_indices = @transform_6, window_bounds = array<i64: 1, 128>}, {pipeline_mode = #tpu.pipeline_mode<synchronous>, transform_indices = @transform_7, window_bounds = array<i64: 128, 128>}, {pipeline_mode = #tpu.pipeline_mode<synchronous>, transform_indices = @transform_8, window_bounds = array<i64: 1, 128>}, {transform_indices = @transform_9, window_bounds = array<i64: 8, 128>}]} {
    %c0 = arith.constant 0 : index
    %c0_0 = arith.constant 0 : index
    %0 = vector.load %arg1[%c0, %c0_0] : memref<8x16xbf16, #tpu.memory_space<vmem>>, vector<8x16xbf16>
    %c0_1 = arith.constant 0 : index
    %c0_2 = arith.constant 0 : index
    %1 = vector.load %arg3[%c0_1, %c0_2] : memref<16x128xbf16, #tpu.memory_space<vmem>>, vector<16x128xbf16>
    %cst = arith.constant dense<0.000000e+00> : vector<8x128xf32>
    %2 = tpu.matmul %0, %1, %cst {dimension_numbers = #tpu.dot_dimension_numbers<[1], [0], [0], [1], [0, 0, 1, 1], [], []>} : vector<8x16xbf16>, vector<16x128xbf16>, vector<8x128xf32> -> vector<8x128xf32>
    %c0_3 = arith.constant 0 : index
    %c0_4 = arith.constant 0 : index
    %3 = vector.load %arg2[%c0_3, %c0_4] : memref<8x8xbf16, #tpu.memory_space<vmem>>, vector<8x8xbf16>
    %c0_5 = arith.constant 0 : index
    %c0_6 = arith.constant 0 : index
    %4 = vector.load %arg4[%c0_5, %c0_6] : memref<8x128xbf16, #tpu.memory_space<vmem>>, vector<8x128xbf16>
    %cst_7 = arith.constant dense<0.000000e+00> : vector<8x128xf32>
    %5 = tpu.matmul %3, %4, %cst_7 {dimension_numbers = #tpu.dot_dimension_numbers<[1], [0], [0], [1], [0, 0, 1, 1], [], []>} : vector<8x8xbf16>, vector<8x128xbf16>, vector<8x128xf32> -> vector<8x128xf32>
    %6 = arith.addf %2, %5 : vector<8x128xf32>
    %c0_8 = arith.constant 0 : index
    %c0_9 = arith.constant 0 : index
    %7 = vector.load %arg5[%c0_8, %c0_9] : memref<1x128xf32, #tpu.memory_space<vmem>>, vector<1x128xf32>
    %8 = vector.broadcast %7 : vector<1x128xf32> to vector<8x128xf32>
    %9 = arith.addf %6, %8 : vector<8x128xf32>
    %cst_10 = arith.constant 0.000000e+00 : f32
    %10 = vector.broadcast %cst_10 : f32 to vector<8x128xf32>
    %11 = arith.maximumf %9, %10 : vector<8x128xf32>
    %12 = arith.truncf %11 : vector<8x128xf32> to vector<8x128xbf16>
    %c0_11 = arith.constant 0 : index
    %c0_12 = arith.constant 0 : index
    %13 = vector.load %arg6[%c0_11, %c0_12] : memref<128x128xbf16, #tpu.memory_space<vmem>>, vector<128x128xbf16>
    %cst_13 = arith.constant dense<0.000000e+00> : vector<8x128xf32>
    %14 = tpu.matmul %12, %13, %cst_13 {dimension_numbers = #tpu.dot_dimension_numbers<[1], [0], [0], [1], [0, 0, 1, 1], [], []>} : vector<8x128xbf16>, vector<128x128xbf16>, vector<8x128xf32> -> vector<8x128xf32>
    %c0_14 = arith.constant 0 : index
    %c0_15 = arith.constant 0 : index
    %15 = vector.load %arg7[%c0_14, %c0_15] : memref<1x128xf32, #tpu.memory_space<vmem>>, vector<1x128xf32>
    %16 = vector.broadcast %15 : vector<1x128xf32> to vector<8x128xf32>
    %17 = arith.addf %14, %16 : vector<8x128xf32>
    %cst_16 = arith.constant 0.000000e+00 : f32
    %18 = vector.broadcast %cst_16 : f32 to vector<8x128xf32>
    %19 = arith.maximumf %17, %18 : vector<8x128xf32>
    %20 = arith.truncf %19 : vector<8x128xf32> to vector<8x128xbf16>
    %c0_17 = arith.constant 0 : index
    %c0_18 = arith.constant 0 : index
    %21 = vector.load %arg8[%c0_17, %c0_18] : memref<128x128xbf16, #tpu.memory_space<vmem>>, vector<128x128xbf16>
    %cst_19 = arith.constant dense<0.000000e+00> : vector<8x128xf32>
    %22 = tpu.matmul %20, %21, %cst_19 {dimension_numbers = #tpu.dot_dimension_numbers<[1], [0], [0], [1], [0, 0, 1, 1], [], []>} : vector<8x128xbf16>, vector<128x128xbf16>, vector<8x128xf32> -> vector<8x128xf32>
    %c0_20 = arith.constant 0 : index
    %c0_21 = arith.constant 0 : index
    %23 = vector.load %arg9[%c0_20, %c0_21] : memref<1x128xf32, #tpu.memory_space<vmem>>, vector<1x128xf32>
    %24 = vector.broadcast %23 : vector<1x128xf32> to vector<8x128xf32>
    %25 = arith.addf %22, %24 : vector<8x128xf32>
    %c0_22 = arith.constant 0 : index
    %c0_23 = arith.constant 0 : index
    %26 = vector.load %arg10[%c0_22, %c0_23] : memref<8x128xf32, #tpu.memory_space<vmem>>, vector<8x128xf32>
    tpu.vector_store %arg10[%c0_22, %c0_23], %25 {strides = array<i32>} : memref<8x128xf32, #tpu.memory_space<vmem>>, vector<8x128xf32>,
    return
  }
  func.func @transform_0(%arg0: i32) -> (i32, i32) {
    %c0_i32 = arith.constant 0 : i32
    %c0_i32_0 = arith.constant 0 : i32
    return %arg0, %c0_i32 : i32, i32
  }
  func.func @transform_1(%arg0: i32) -> (i32, i32) {
    %c0_i32 = arith.constant 0 : i32
    %c0_i32_0 = arith.constant 0 : i32
    return %arg0, %c0_i32 : i32, i32
  }
  func.func @transform_2(%arg0: i32) -> (i32, i32) {
    %c0_i32 = arith.constant 0 : i32
    %c0_i32_0 = arith.constant 0 : i32
    %c0_i32_1 = arith.constant 0 : i32
    return %c0_i32, %c0_i32_0 : i32, i32
  }
  func.func @transform_3(%arg0: i32) -> (i32, i32) {
    %c0_i32 = arith.constant 0 : i32
    %c0_i32_0 = arith.constant 0 : i32
    %c0_i32_1 = arith.constant 0 : i32
    return %c0_i32, %c0_i32_0 : i32, i32
  }
  func.func @transform_4(%arg0: i32) -> (i32, i32) {
    %c0_i32 = arith.constant 0 : i32
    %c0_i32_0 = arith.constant 0 : i32
    %c0_i32_1 = arith.constant 0 : i32
    return %c0_i32, %c0_i32_0 : i32, i32
  }
  func.func @transform_5(%arg0: i32) -> (i32, i32) {
    %c0_i32 = arith.constant 0 : i32
    %c0_i32_0 = arith.constant 0 : i32
    %c0_i32_1 = arith.constant 0 : i32
    return %c0_i32, %c0_i32_0 : i32, i32
  }
  func.func @transform_6(%arg0: i32) -> (i32, i32) {
    %c0_i32 = arith.constant 0 : i32
    %c0_i32_0 = arith.constant 0 : i32
    %c0_i32_1 = arith.constant 0 : i32
    return %c0_i32, %c0_i32_0 : i32, i32
  }
  func.func @transform_7(%arg0: i32) -> (i32, i32) {
    %c0_i32 = arith.constant 0 : i32
    %c0_i32_0 = arith.constant 0 : i32
    %c0_i32_1 = arith.constant 0 : i32
    return %c0_i32, %c0_i32_0 : i32, i32
  }
  func.func @transform_8(%arg0: i32) -> (i32, i32) {
    %c0_i32 = arith.constant 0 : i32
    %c0_i32_0 = arith.constant 0 : i32
    %c0_i32_1 = arith.constant 0 : i32
    return %c0_i32, %c0_i32_0 : i32, i32
  }
  func.func @transform_9(%arg0: i32) -> (i32, i32) {
    %c0_i32 = arith.constant 0 : i32
    %c0_i32_0 = arith.constant 0 : i32
    return %arg0, %c0_i32 : i32, i32
  }
}

</mosaic_0001>

<llo_original>
// kernel: qfunction_forward.1
$region0: #{qfunction_forward.1}
  #allocation0 [shape = 'u32[]', space=smem, size = 0x4, offset = 0x4, fixed_abs, tag = 'smem constant byte address 0x4 - core index']
  #allocation1 [shape = 'u32[144,128]{1,0:T(1,128)}', space=vmem, size = 0x12000, scoped, tag = 'internal scratch']
  %s0 = inlined_call_operand.vmem [shape: bf16[8,16], index: 0, kind: input, shape index: {}]
  %s1 = inlined_call_operand.vmem [shape: bf16[8,8], index: 1, kind: input, shape index: {}]
  %s2 = inlined_call_operand.vmem [shape: bf16[16,128], index: 2, kind: input, shape index: {}]
  %s3 = inlined_call_operand.vmem [shape: bf16[8,128], index: 3, kind: input, shape index: {}]
  %s4 = inlined_call_operand.vmem [shape: f32[1,128], index: 4, kind: input, shape index: {}]
  %s5 = inlined_call_operand.hbm [shape: bf16[128,128], index: 5, kind: input, shape index: {}]
  %s6 = inlined_call_operand.vmem [shape: f32[1,128], index: 6, kind: input, shape index: {}]
  %s7 = inlined_call_operand.hbm [shape: bf16[128,128], index: 7, kind: input, shape index: {}]
  %s8 = inlined_call_operand.vmem [shape: f32[1,128], index: 8, kind: input, shape index: {}]
  %s9 = inlined_call_operand.vmem [shape: f32[8,128], index: 9, kind: output, shape index: {}]
  %s10 = sld [smem:[#allocation0]]
  $region54: #{qfunction_forward.1} parent=0
    _
  %s12 = ssub.s32 1, %s10
  %s13 = scalar_select 0, %s12, %s10
  $region1: #{qfunction_forward.1} parent=0
    #allocation2 [shape = 'u8[32768]{0}', space=vmem, size = 0x8000, scoped, tag = 'input window, operand 5, single buffered']
    #allocation3 [shape = 's32[1]{0}', space=sflag, size = 0x4, scoped, tag = 'scoped memory for qfunction_forward.1']
    #allocation4 [shape = 'u8[32768]{0}', space=vmem, size = 0x8000, scoped, tag = 'input window, operand 7, single buffered']
    #allocation5 [shape = 's32[1]{0}', space=sflag, size = 0x4, scoped, tag = 'scoped memory for qfunction_forward.1']
    %14 = vsyncpa [#allocation3], 0
    %15 = vsyncpa [#allocation5], 0
    // Predicated region
    $region2: #{qfunction_forward.1} parent=1 // pred_check
      _
    $region3: #{qfunction_forward.1} parent=1 // pred_check_branch
      %17 = sbr.rel (0) target = $region5
    $region4: #{qfunction_forward.1} parent=1 // pred_region
      _
    $region5: #{qfunction_forward.1} parent=1 // pred_fallthru
      _
    // Predicated region
    $region6: #{qfunction_forward.1} parent=1 // pred_check
      _
    $region7: #{qfunction_forward.1} parent=1 // pred_check_branch
      %19 = sbr.rel (0) target = $region9
    $region8: #{qfunction_forward.1} parent=1 // pred_region
      _
    $region9: #{qfunction_forward.1} parent=1 // pred_fallthru
      _
    // Predicated region
    $region10: #{qfunction_forward.1} parent=1 // pred_check
      _
    $region11: #{qfunction_forward.1} parent=1 // pred_check_branch
      %21 = sbr.rel (0) target = $region13
    $region12: #{qfunction_forward.1} parent=1 // pred_region
      _
    $region13: #{qfunction_forward.1} parent=1 // pred_fallthru
      _
    // Predicated region
    $region14: #{qfunction_forward.1} parent=1 // pred_check
      _
    $region15: #{qfunction_forward.1} parent=1 // pred_check_branch
      %23 = sbr.rel (0) target = $region17
    $region16: #{qfunction_forward.1} parent=1 // pred_region
      _
    $region17: #{qfunction_forward.1} parent=1 // pred_fallthru
      _
    // Predicated region
    $region18: #{qfunction_forward.1} parent=1 // pred_check
      _
    $region19: #{qfunction_forward.1} parent=1 // pred_check_branch
      %25 = sbr.rel (0) target = $region21
    $region20: #{qfunction_forward.1} parent=1 // pred_region
      _
    $region21: #{qfunction_forward.1} parent=1 // pred_fallthru
      _
    // Predicated region
    $region22: #{qfunction_forward.1} parent=1 // pred_check
      _
    $region23: #{qfunction_forward.1} parent=1 // pred_check_branch
      %27 = sbr.rel (0) target = $region25
    $region24: #{qfunction_forward.1} parent=1 // pred_region
      %s29 = ssub.s32 1024, 1024
      %30 = vsyncadd [#allocation3], %s29
      %s31 = sshll.u32 [#allocation2], 4
      %s32 = int_to_ptr.vmem [resolvable:$true] %s31
      %37 = dma.hbm_to_vmem [thread:$0]  %s5, 1024, %s32, [#allocation3], 64, 64, 4
    $region25: #{qfunction_forward.1} parent=1 // pred_fallthru
      _
    // Predicated region
    $region26: #{qfunction_forward.1} parent=1 // pred_check
      _
    $region27: #{qfunction_forward.1} parent=1 // pred_check_branch
      %39 = sbr.rel (0) target = $region29
    $region28: #{qfunction_forward.1} parent=1 // pred_region
      _
    $region29: #{qfunction_forward.1} parent=1 // pred_fallthru
      _
    // Predicated region
    $region30: #{qfunction_forward.1} parent=1 // pred_check
      _
    $region31: #{qfunction_forward.1} parent=1 // pred_check_branch
      %41 = sbr.rel (0) target = $region33
    $region32: #{qfunction_forward.1} parent=1 // pred_region
      %s43 = ssub.s32 1024, 1024
      %44 = vsyncadd [#allocation5], %s43
      %s45 = sshll.u32 [#allocation4], 4
      %s46 = int_to_ptr.vmem [resolvable:$true] %s45
      %51 = dma.hbm_to_vmem [thread:$0]  %s7, 1024, %s46, [#allocation5], 64, 64, 4
    $region33: #{qfunction_forward.1} parent=1 // pred_fallthru
      _
    // Predicated region
    $region34: #{qfunction_forward.1} parent=1 // pred_check
      _
    $region35: #{qfunction_forward.1} parent=1 // pred_check_branch
      %53 = sbr.rel (0) target = $region37
    $region36: #{qfunction_forward.1} parent=1 // pred_region
      _
    $region37: #{qfunction_forward.1} parent=1 // pred_fallthru
      _
    // Predicated region
    $region38: #{qfunction_forward.1} parent=1 // pred_check
      _
    $region39: #{qfunction_forward.1} parent=1 // pred_check_branch
      %55 = sbr.rel (0) target = $region41
    $region40: #{qfunction_forward.1} parent=1 // pred_region
      %56 = dma.done [#allocation3], 1024
    $region41: #{qfunction_forward.1} parent=1 // pred_fallthru
      _
    // Predicated region
    $region42: #{qfunction_forward.1} parent=1 // pred_check
      _
    $region43: #{qfunction_forward.1} parent=1 // pred_check_branch
      %58 = sbr.rel (0) target = $region45
    $region44: #{qfunction_forward.1} parent=1 // pred_region
      %59 = dma.done [#allocation5], 1024
    $region45: #{qfunction_forward.1} parent=1 // pred_fallthru
      _
    %v61 = vld [vmem:[%s0] sm:$0xf]
    %v62 = vld [vmem:[%s2] sm:$0xf]
    %v63 = vld [vmem:[%s2 + $0x4] sm:$0xf]
    %v64 = vld [vmem:[%s1] sm:$0xf]
    %v65 = vld [vmem:[%s3] sm:$0xf]
    %vm66 = vcmask 64512
    %v68 = vsel %vm66, %v64, 0
    %vm70 = vcmask 1043456
    %v72 = vsel %vm70, %v65, 0
    %74 = vmatprep.subr.bf16.mxu0 0
    %75 = vmatpush1.bf16.msra.mxu0 0
    %76 = vmatprep.subr.bf16.mxu0 0
    %77 = vmatpush1.bf16.msra.mxu0 0
    %78 = vmatprep.subr.bf16.mxu0 0
    %79 = vmatpush1.bf16.msra.mxu0 0
    %80 = vmatprep.subr.bf16.mxu0 0
    %81 = vmatpush1.bf16.msra.mxu0 0
    %82 = vmatprep.subr.bf16.mxu0 0
    %83 = vmatpush1.bf16.msra.mxu0 0
    %84 = vmatprep.subr.bf16.mxu0 0
    %85 = vmatpush1.bf16.msra.mxu0 0
    %86 = vmatprep.subr.bf16.mxu0 0
    %87 = vmatpush1.bf16.msra.mxu0 0
    %88 = vmatprep.subr.bf16.mxu0 0
    %89 = vmatpush1.bf16.msra.mxu0 %v72
    %90 = vmatprep.subr.bf16.mxu0 0
    %91 = vmatpush2.bf16.msra.mxu0 0
    %92 = vmatprep.subr.bf16.mxu0 0
    %93 = vmatpush2.bf16.msra.mxu0 0
    %94 = vmatprep.subr.bf16.mxu0 0
    %95 = vmatpush2.bf16.msra.mxu0 0
    %96 = vmatprep.subr.bf16.mxu0 0
    %97 = vmatpush2.bf16.msra.mxu0 0
    %98 = vmatprep.subr.bf16.mxu0 0
    %99 = vmatpush2.bf16.msra.mxu0 0
    %100 = vmatprep.subr.bf16.mxu0 0
    %101 = vmatpush2.bf16.msra.mxu0 0
    %102 = vmatprep.subr.bf16.mxu0 0
    %103 = vmatpush2.bf16.msra.mxu0 0
    %104 = vmatprep.subr.bf16.mxu0 0
    %105 = vmatpush2.bf16.msra.mxu0 0
    %106 = vmatprep.mubr.bf16.mxu0 0
    %107 = vmatmul.mubr.bf16.gmra.mxu0 %v68
    %v108 = vpop.f32.mrf.mxu0
    %v109 = vadd.f32 0.0, %v108
    %v110 = vpop.f32.mrf.mxu0
    %v111 = vpop.f32.mrf.mxu0
    %v112 = vpop.f32.mrf.mxu0
    %113 = vdwg.mxu0
    %v116 = vunpack.c.l.b16 %v62
    %v117 = vunpack.c.l.b16 %v63
    %v118 = vpack.c.b16 %v117, %v116
    %vm120 = vcmask 130048
    %v122 = vsel %vm120, %v61, 0
    %124 = vmatprep.subr.bf16.mxu0 0
    %125 = vmatpush1.bf16.msra.mxu0 0
    %126 = vmatprep.subr.bf16.mxu0 0
    %127 = vmatpush1.bf16.msra.mxu0 0
    %128 = vmatprep.subr.bf16.mxu0 0
    %129 = vmatpush1.bf16.msra.mxu0 0
    %130 = vmatprep.subr.bf16.mxu0 0
    %131 = vmatpush1.bf16.msra.mxu0 0
    %132 = vmatprep.subr.bf16.mxu0 0
    %133 = vmatpush1.bf16.msra.mxu0 0
    %134 = vmatprep.subr.bf16.mxu0 0
    %135 = vmatpush1.bf16.msra.mxu0 0
    %136 = vmatprep.subr.bf16.mxu0 0
    %137 = vmatpush1.bf16.msra.mxu0 0
    %138 = vmatprep.subr.bf16.mxu0 0
    %139 = vmatpush1.bf16.msra.mxu0 %v118
    %140 = vmatprep.subr.bf16.mxu0 0
    %141 = vmatpush2.bf16.msra.mxu0 0
    %142 = vmatprep.subr.bf16.mxu0 0
    %143 = vmatpush2.bf16.msra.mxu0 0
    %144 = vmatprep.subr.bf16.mxu0 0
    %145 = vmatpush2.bf16.msra.mxu0 0
    %146 = vmatprep.subr.bf16.mxu0 0
    %147 = vmatpush2.bf16.msra.mxu0 0
    %148 = vmatprep.subr.bf16.mxu0 0
    %149 = vmatpush2.bf16.msra.mxu0 0
    %150 = vmatprep.subr.bf16.mxu0 0
    %151 = vmatpush2.bf16.msra.mxu0 0
    %152 = vmatprep.subr.bf16.mxu0 0
    %153 = vmatpush2.bf16.msra.mxu0 0
    %154 = vmatprep.subr.bf16.mxu0 0
    %155 = vmatpush2.bf16.msra.mxu0 0
    %156 = vmatprep.mubr.bf16.mxu0 0
    %157 = vmatmul.mubr.bf16.gmra.mxu0 %v122
    %v158 = vpop.f32.mrf.mxu0
    %v159 = vadd.f32 %v109, %v158
    %v160 = vpop.f32.mrf.mxu0
    %v161 = vpop.f32.mrf.mxu0
    %v162 = vpop.f32.mrf.mxu0
    %163 = vdwg.mxu0
    %v164 = vld [vmem:[%s4] sm:$0x1]
    %v166 = vlaneseq
    %v167 = vshrl.u32 %v166, 7
    %v168 = vsub.s32 0, %v167
    %v169 = vrot.slane %v164, %v168
    %v171 = vadd.f32 %v159, %v169
    %v172 = vmax.f32 %v171, 0.0
    %v173 = vpack.c.bf16 %v172, %v172
    %v174 = vld [vmem:[#allocation2] sm:$0xf]
    %v175 = vld [vmem:[#allocation2 + $0x4] sm:$0xf]
    %v176 = vld [vmem:[#allocation2 + $0x8] sm:$0xf]
    %v177 = vld [vmem:[#allocation2 + $0xc] sm:$0xf]
    %v178 = vld [vmem:[#allocation2 + $0x10] sm:$0xf]
    %v179 = vld [vmem:[#allocation2 + $0x14] sm:$0xf]
    %v180 = vld [vmem:[#allocation2 + $0x18] sm:$0xf]
    %v181 = vld [vmem:[#allocation2 + $0x1c] sm:$0xf]
    %v182 = vld [vmem:[#allocation2 + $0x20] sm:$0xf]
    %v183 = vld [vmem:[#allocation2 + $0x24] sm:$0xf]
    %v184 = vld [vmem:[#allocation2 + $0x28] sm:$0xf]
    %v185 = vld [vmem:[#allocation2 + $0x2c] sm:$0xf]
    %v186 = vld [vmem:[#allocation2 + $0x30] sm:$0xf]
    %v187 = vld [vmem:[#allocation2 + $0x34] sm:$0xf]
    %v188 = vld [vmem:[#allocation2 + $0x38] sm:$0xf]
    %v189 = vld [vmem:[#allocation2 + $0x3c] sm:$0xf]
    %v190 = vld [vmem:[%s6] sm:$0x1]
    %v192 = vlaneseq
    %v193 = vshrl.u32 %v192, 7
    %v194 = vsub.s32 0, %v193
    %v195 = vrot.slane %v190, %v194
    %v213 = vunpack.c.l.b16 %v174
    %v214 = vunpack.c.l.b16 %v175
    %v215 = vunpack.c.l.b16 %v176
    %v216 = vunpack.c.l.b16 %v177
    %v217 = vunpack.c.l.b16 %v178
    %v218 = vunpack.c.l.b16 %v179
    %v219 = vunpack.c.l.b16 %v180
    %v220 = vunpack.c.l.b16 %v181
    %v221 = vunpack.c.l.b16 %v182
    %v222 = vunpack.c.l.b16 %v183
    %v223 = vunpack.c.l.b16 %v184
    %v224 = vunpack.c.l.b16 %v185
    %v225 = vunpack.c.l.b16 %v186
    %v226 = vunpack.c.l.b16 %v187
    %v227 = vunpack.c.l.b16 %v188
    %v228 = vunpack.c.l.b16 %v189
    %v229 = vpack.c.b16 %v214, %v213
    %v230 = vpack.c.b16 %v216, %v215
    %v231 = vpack.c.b16 %v218, %v217
    %v232 = vpack.c.b16 %v220, %v219
    %v233 = vpack.c.b16 %v222, %v221
    %v234 = vpack.c.b16 %v224, %v223
    %v235 = vpack.c.b16 %v226, %v225
    %v236 = vpack.c.b16 %v228, %v227
    %245 = vmatprep.subr.bf16.mxu0 0
    %246 = vmatpush1.bf16.msra.mxu0 %v236
    %247 = vmatprep.subr.bf16.mxu0 0
    %248 = vmatpush1.bf16.msra.mxu0 %v235
    %249 = vmatprep.subr.bf16.mxu0 0
    %250 = vmatpush1.bf16.msra.mxu0 %v234
    %251 = vmatprep.subr.bf16.mxu0 0
    %252 = vmatpush1.bf16.msra.mxu0 %v233
    %253 = vmatprep.subr.bf16.mxu0 0
    %254 = vmatpush1.bf16.msra.mxu0 %v232
    %255 = vmatprep.subr.bf16.mxu0 0
    %256 = vmatpush1.bf16.msra.mxu0 %v231
    %257 = vmatprep.subr.bf16.mxu0 0
    %258 = vmatpush1.bf16.msra.mxu0 %v230
    %259 = vmatprep.subr.bf16.mxu0 0
    %260 = vmatpush1.bf16.msra.mxu0 %v229
    %261 = vmatprep.subr.bf16.mxu0 0
    %262 = vmatpush2.bf16.msra.mxu0 0
    %263 = vmatprep.subr.bf16.mxu0 0
    %264 = vmatpush2.bf16.msra.mxu0 0
    %265 = vmatprep.subr.bf16.mxu0 0
    %266 = vmatpush2.bf16.msra.mxu0 0
    %267 = vmatprep.subr.bf16.mxu0 0
    %268 = vmatpush2.bf16.msra.mxu0 0
    %269 = vmatprep.subr.bf16.mxu0 0
    %270 = vmatpush2.bf16.msra.mxu0 0
    %271 = vmatprep.subr.bf16.mxu0 0
    %272 = vmatpush2.bf16.msra.mxu0 0
    %273 = vmatprep.subr.bf16.mxu0 0
    %274 = vmatpush2.bf16.msra.mxu0 0
    %275 = vmatprep.subr.bf16.mxu0 0
    %276 = vmatpush2.bf16.msra.mxu0 0
    %277 = vmatprep.mubr.bf16.mxu0 0
    %278 = vmatmul.mubr.bf16.gmra.mxu0 %v173
    %v279 = vpop.f32.mrf.mxu0
    %v280 = vadd.f32 %v195, %v279
    %v281 = vpop.f32.mrf.mxu0
    %v282 = vpop.f32.mrf.mxu0
    %v283 = vpop.f32.mrf.mxu0
    %284 = vdwg.mxu0
    %v285 = vmax.f32 %v280, 0.0
    %v286 = vpack.c.bf16 %v285, %v285
    %v287 = vld [vmem:[#allocation4] sm:$0xf]
    %v288 = vld [vmem:[#allocation4 + $0x4] sm:$0xf]
    %v289 = vld [vmem:[#allocation4 + $0x8] sm:$0xf]
    %v290 = vld [vmem:[#allocation4 + $0xc] sm:$0xf]
    %v291 = vld [vmem:[#allocation4 + $0x10] sm:$0xf]
    %v292 = vld [vmem:[#allocation4 + $0x14] sm:$0xf]
    %v293 = vld [vmem:[#allocation4 + $0x18] sm:$0xf]
    %v294 = vld [vmem:[#allocation4 + $0x1c] sm:$0xf]
    %v295 = vld [vmem:[#allocation4 + $0x20] sm:$0xf]
    %v296 = vld [vmem:[#allocation4 + $0x24] sm:$0xf]
    %v297 = vld [vmem:[#allocation4 + $0x28] sm:$0xf]
    %v298 = vld [vmem:[#allocation4 + $0x2c] sm:$0xf]
    %v299 = vld [vmem:[#allocation4 + $0x30] sm:$0xf]
    %v300 = vld [vmem:[#allocation4 + $0x34] sm:$0xf]
    %v301 = vld [vmem:[#allocation4 + $0x38] sm:$0xf]
    %v302 = vld [vmem:[#allocation4 + $0x3c] sm:$0xf]
    %v303 = vld [vmem:[%s8] sm:$0x1]
    %v305 = vlaneseq
    %v306 = vshrl.u32 %v305, 7
    %v307 = vsub.s32 0, %v306
    %v308 = vrot.slane %v303, %v307
    %v326 = vunpack.c.l.b16 %v287
    %v327 = vunpack.c.l.b16 %v288
    %v328 = vunpack.c.l.b16 %v289
    %v329 = vunpack.c.l.b16 %v290
    %v330 = vunpack.c.l.b16 %v291
    %v331 = vunpack.c.l.b16 %v292
    %v332 = vunpack.c.l.b16 %v293
    %v333 = vunpack.c.l.b16 %v294
    %v334 = vunpack.c.l.b16 %v295
    %v335 = vunpack.c.l.b16 %v296
    %v336 = vunpack.c.l.b16 %v297
    %v337 = vunpack.c.l.b16 %v298
    %v338 = vunpack.c.l.b16 %v299
    %v339 = vunpack.c.l.b16 %v300
    %v340 = vunpack.c.l.b16 %v301
    %v341 = vunpack.c.l.b16 %v302
    %v342 = vpack.c.b16 %v327, %v326
    %v343 = vpack.c.b16 %v329, %v328
    %v344 = vpack.c.b16 %v331, %v330
    %v345 = vpack.c.b16 %v333, %v332
    %v346 = vpack.c.b16 %v335, %v334
    %v347 = vpack.c.b16 %v337, %v336
    %v348 = vpack.c.b16 %v339, %v338
    %v349 = vpack.c.b16 %v341, %v340
    %358 = vmatprep.subr.bf16.mxu0 0
    %359 = vmatpush1.bf16.msra.mxu0 %v349
    %360 = vmatprep.subr.bf16.mxu0 0
    %361 = vmatpush1.bf16.msra.mxu0 %v348
    %362 = vmatprep.subr.bf16.mxu0 0
    %363 = vmatpush1.bf16.msra.mxu0 %v347
    %364 = vmatprep.subr.bf16.mxu0 0
    %365 = vmatpush1.bf16.msra.mxu0 %v346
    %366 = vmatprep.subr.bf16.mxu0 0
    %367 = vmatpush1.bf16.msra.mxu0 %v345
    %368 = vmatprep.subr.bf16.mxu0 0
    %369 = vmatpush1.bf16.msra.mxu0 %v344
    %370 = vmatprep.subr.bf16.mxu0 0
    %371 = vmatpush1.bf16.msra.mxu0 %v343
    %372 = vmatprep.subr.bf16.mxu0 0
    %373 = vmatpush1.bf16.msra.mxu0 %v342
    %374 = vmatprep.subr.bf16.mxu0 0
    %375 = vmatpush2.bf16.msra.mxu0 0
    %376 = vmatprep.subr.bf16.mxu0 0
    %377 = vmatpush2.bf16.msra.mxu0 0
    %378 = vmatprep.subr.bf16.mxu0 0
    %379 = vmatpush2.bf16.msra.mxu0 0
    %380 = vmatprep.subr.bf16.mxu0 0
    %381 = vmatpush2.bf16.msra.mxu0 0
    %382 = vmatprep.subr.bf16.mxu0 0
    %383 = vmatpush2.bf16.msra.mxu0 0
    %384 = vmatprep.subr.bf16.mxu0 0
    %385 = vmatpush2.bf16.msra.mxu0 0
    %386 = vmatprep.subr.bf16.mxu0 0
    %387 = vmatpush2.bf16.msra.mxu0 0
    %388 = vmatprep.subr.bf16.mxu0 0
    %389 = vmatpush2.bf16.msra.mxu0 0
    %390 = vmatprep.mubr.bf16.mxu0 0
    %391 = vmatmul.mubr.bf16.gmra.mxu0 %v286
    %v392 = vpop.f32.mrf.mxu0
    %v393 = vadd.f32 %v308, %v392
    %v394 = vpop.f32.mrf.mxu0
    %v395 = vpop.f32.mrf.mxu0
    %v396 = vpop.f32.mrf.mxu0
    %397 = vdwg.mxu0
    %398 = vst [vmem:[%s9] sm:$0xff] %v393
    // Predicated region
    $region46: #{qfunction_forward.1} parent=1 // pred_check
      _
    $region47: #{qfunction_forward.1} parent=1 // pred_check_branch
      %400 = sbr.rel (0) target = $region49
    $region48: #{qfunction_forward.1} parent=1 // pred_region
      _
    $region49: #{qfunction_forward.1} parent=1 // pred_fallthru
      _
    // Predicated region
    $region50: #{qfunction_forward.1} parent=1 // pred_check
      _
    $region51: #{qfunction_forward.1} parent=1 // pred_check_branch
      %402 = sbr.rel (0) target = $region53
    $region52: #{qfunction_forward.1} parent=1 // pred_region
      _
    $region53: #{qfunction_forward.1} parent=1 // pred_fallthru
      _
    %403 = vsyncpa [#allocation3], 1
    %404 = vsyncpa [#allocation5], 1

</llo_original>
